<compile_context>
chip_gen: v7x
topology: tpu7x:2x2x1
jax: 0.10.0
libtpu: 0.0.40
codegen_flags: <defaults>
</compile_context>

<pallas_src>
import math

import jax
import jax.numpy as jnp
from jax.experimental import pallas as pl
from jax.experimental.pallas import tpu as pltpu

_TILE_BYTES = 8 * 1024 * 1024    # per-tile budget; in+out double-buffered = 4x = 32 MiB
_VMEM_LIMIT_BYTES = 48 << 20     # safe on v7x (64 MiB phys) and v5e/v6e (128 MiB phys)


def _copy_kernel(x_ref, o_ref):
    # Pure tile copy; the data movement is the whole job.
    o_ref[...] = x_ref[...]


def _min_sublane_rows(dtype) -> int:
    # Packed-sublane minimum tile height: 8 rows f32, 16 bf16/f16, 32 int8/fp8.
    return max(8, 32 // jnp.dtype(dtype).itemsize)


def _pick_lane_width(total: int, min_rows: int) -> int:
    """Largest lane width (multiple of 128) dividing `total`, preferring shapes
    with >= min_rows sublane rows. Returns 0 if nothing divides."""
    cands = (2048, 1024, 512, 256, 128)
    for c in cands:                       # prefer wide AND enough rows
        if total % c == 0 and total // c >= min_rows:
            return c
    for c in cands:                       # fall back: wide, few rows
        if total % c == 0:
            return c
    return 0


def _pick_row_tile(rows: int, bytes_per_row: int, min_rows: int) -> int:
    """Largest sublane-aligned row tile whose bytes fit the per-tile budget."""
    if rows * bytes_per_row <= _TILE_BYTES:
        return rows                       # full extent: always a legal block
    rt = max(1, _TILE_BYTES // bytes_per_row)
    rt = (rt // min_rows) * min_rows      # dtype-aware sublane alignment
    rt = max(rt, min_rows)
    return min(rt, rows)


def _pallas_copy(x2d: jax.Array, row_tile: int, donate: bool) -> jax.Array:
    rows, cols = x2d.shape
    itemsize = jnp.dtype(x2d.dtype).itemsize
    grid = (pl.cdiv(rows, row_tile),)     # ragged last block is fine for a copy
    # TODO(synk): on v7x, CORE_PARALLEL / pl.core_map could shard the copy over
    # the two TensorCores; "parallel" is kept for portability (no-op on v5e/v6e).
    return pl.pallas_call(
        _copy_kernel,
        out_shape=jax.ShapeDtypeStruct((rows, cols), x2d.dtype),
        grid=grid,
        in_specs=[pl.BlockSpec((row_tile, cols), lambda i: (i, 0))],
        out_specs=pl.BlockSpec((row_tile, cols), lambda i: (i, 0)),
        input_output_aliases=({0: 0} if donate else {}),
        cost_estimate=pl.CostEstimate(
            flops=0, transcendentals=0,
            bytes_accessed=2 * rows * cols * itemsize),
        compiler_params=pltpu.CompilerParams(
            dimension_semantics=("parallel",),
            vmem_limit_bytes=_VMEM_LIMIT_BYTES),
    )(x2d)


def flatten(feat: jax.Array, *, materialize: bool = False,
            donate_input: bool = True) -> jax.Array:
    """Pallas equivalent of `feat.view(feat.size(0), -1)` (contiguous NCHW).

    Default (`materialize=False`): metadata-only reshape -- zero HBM traffic,
    which is the right answer for a flatten (also covers the tiny-tensor case).
    `materialize=True`: explicit Pallas copy (a materialization/fusion point).
    """
    b = feat.shape[0]
    d = int(math.prod(feat.shape[1:]))

    if not materialize:
        return feat.reshape(b, d)         # zero-cost bitcast/view

    itemsize = jnp.dtype(feat.dtype).itemsize
    min_rows = _min_sublane_rows(feat.dtype)
    total = b * d
    x2d = feat.reshape(b, d)

    lane = _pick_lane_width(total, min_rows)
    if lane == 0:
        # Awkward size (total not a multiple of 128): tile over the batch/row
        # dim with a block spanning the full last dim (legal even if d % 128
        # != 0; stores may be masked but the copy stays pipelined & VMEM-safe).
        row_tile = _pick_row_tile(b, d * itemsize, min_rows)
        return _pallas_copy(x2d, row_tile, donate_input)

    rows = total // lane
    slab = x2d.reshape(rows, lane)        # zero-cost layout plumbing
    row_tile = _pick_row_tile(rows, lane * itemsize, min_rows)
    out = _pallas_copy(slab, row_tile, donate_input)
    return out.reshape(b, d)              # zero-cost view back to (B, D)


if __name__ == "__main__":
    key = jax.random.PRNGKey(0)
    # Small conv-feature-like input: batch=2, channels=4, spatial=16x16 (NCHW).
    x = jax.random.normal(key, (2, 4, 16, 16), dtype=jnp.float32)
    ref = x.reshape(x.shape[0], -1)

    # Default path: pure metadata reshape (no kernel).
    out_view = flatten(x)
    assert out_view.shape == (2, 4 * 16 * 16)
    assert bool(jnp.array_equal(out_view, ref))

    # Explicit materialization path: exercises the lane-dense Pallas copy.
    out = flatten(x, materialize=True)
    out = jax.block_until_ready(out)
    assert out.shape == (2, 4 * 16 * 16), out.shape
    assert out.dtype == x.dtype
    assert bool(jnp.array_equal(out, ref))

    # Awkward-size fallback path (flattened dim not a multiple of 128).
    y = jax.random.normal(jax.random.PRNGKey(1), (4, 3, 5, 7), dtype=jnp.float32)
    out_y = jax.block_until_ready(flatten(y, materialize=True))
    assert out_y.shape == (4, 3 * 5 * 7)
    assert bool(jnp.array_equal(out_y, y.reshape(4, -1)))

    print("KERNEL_OK")
</pallas_src>

<mosaic_0001>
module attributes {stable_mosaic.version = 11 : i64} {
  func.func @_copy_kernel(%arg0: i32, %arg1: memref<8x256xf32, #tpu.memory_space<vmem>>, %arg2: memref<8x256xf32, #tpu.memory_space<vmem>>) attributes {dimension_semantics = [#tpu.dimension_semantics<parallel>], iteration_bounds = array<i64: 1>, scalar_prefetch = 0 : i64, scratch_operands = 0 : i64, tpu.core_type = #tpu.core_type<tc>, window_params = [{transform_indices = @transform_0, window_bounds = array<i64: 8, 256>}, {transform_indices = @transform_1, window_bounds = array<i64: 8, 256>}]} {
    %c0 = arith.constant 0 : index
    %c0_0 = arith.constant 0 : index
    %0 = vector.load %arg1[%c0, %c0_0] : memref<8x256xf32, #tpu.memory_space<vmem>>, vector<8x256xf32>
    %c0_1 = arith.constant 0 : index
    %c0_2 = arith.constant 0 : index
    %1 = vector.load %arg2[%c0_1, %c0_2] : memref<8x256xf32, #tpu.memory_space<vmem>>, vector<8x256xf32>
    tpu.vector_store %arg2[%c0_1, %c0_2], %0 {strides = array<i32>} : memref<8x256xf32, #tpu.memory_space<vmem>>, vector<8x256xf32>,
    return
  }
  func.func @transform_0(%arg0: i32) -> (i32, i32) {
    %c0_i32 = arith.constant 0 : i32
    %c0_i32_0 = arith.constant 0 : i32
    return %arg0, %c0_i32 : i32, i32
  }
  func.func @transform_1(%arg0: i32) -> (i32, i32) {
    %c0_i32 = arith.constant 0 : i32
    %c0_i32_0 = arith.constant 0 : i32
    return %arg0, %c0_i32 : i32, i32
  }
}

</mosaic_0001>

<llo_original>
// kernel: tpu_custom_call.1
$region0: #{tpu_custom_call.1}
  #allocation0 [shape = 'u32[]', space=smem, size = 0x4, offset = 0x4, fixed_abs, tag = 'smem constant byte address 0x4 - core index']
  #allocation1 [shape = 'u32[144,128]{1,0:T(1,128)}', space=vmem, size = 0x12000, scoped, tag = 'internal scratch']
  %s0 = inlined_call_operand.hbm [shape: f32[8,256], index: 0, kind: input, shape index: {}, may-alias: {0,1}]
  %s1 = inlined_call_operand.hbm [shape: f32[8,256], index: 1, kind: output, shape index: {}, may-alias: {0,1}]
  %s2 = sld [smem:[#allocation0]]
  $region18: #{tpu_custom_call.1} parent=0
    _
  %s4 = ssub.s32 1, %s2
  %s5 = scalar_select 0, %s4, %s2
  $region1: #{tpu_custom_call.1} parent=0
    #allocation2 [shape = 'u8[8192]{0}', space=vmem, size = 0x2000, scoped, tag = 'input window, operand 0, single buffered']
    #allocation3 [shape = 's32[1]{0}', space=sflag, size = 0x4, scoped, tag = 'scoped memory for tpu_custom_call.1']
    #allocation4 [shape = 's32[1]{0}', space=sflag, size = 0x4, scoped, tag = 'scoped memory for tpu_custom_call.1']
    #allocation5 [shape = 'u8[8192]{0}', space=vmem, size = 0x2000, scoped, tag = 'output window, operand 0, single buffered']
    %6 = vsyncpa [#allocation3], 0
    %7 = vsyncpa [#allocation4], 0
    // Predicated region
    $region2: #{tpu_custom_call.1} parent=1 // pred_check
      _
    $region3: #{tpu_custom_call.1} parent=1 // pred_check_branch
      %9 = sbr.rel (0) target = $region5
    $region4: #{tpu_custom_call.1} parent=1 // pred_region
      %s11 = ssub.s32 256, 256
      %12 = vsyncadd [#allocation3], %s11
      %s14 = sshll.u32 [#allocation2], 4
      %s15 = int_to_ptr.vmem [resolvable:$true] %s14
      %17 = dma.hbm_to_vmem [thread:$0]  %s0, 256, %s15, [#allocation3]
    $region5: #{tpu_custom_call.1} parent=1 // pred_fallthru
      _
    // Predicated region
    $region6: #{tpu_custom_call.1} parent=1 // pred_check
      _
    $region7: #{tpu_custom_call.1} parent=1 // pred_check_branch
      %19 = sbr.rel (0) target = $region9
    $region8: #{tpu_custom_call.1} parent=1 // pred_region
      %20 = dma.done [#allocation3], 256
    $region9: #{tpu_custom_call.1} parent=1 // pred_fallthru
      _
    %v21 = vld [vmem:[#allocation2] sm:$0xff]
    %v22 = vld [vmem:[#allocation2 + $0x8] sm:$0xff]
    %23 = vst [vmem:[#allocation5] sm:$0xff] %v21
    %24 = vst [vmem:[#allocation5 + $0x8] sm:$0xff] %v22
    // Predicated region
    $region10: #{tpu_custom_call.1} parent=1 // pred_check
      _
    $region11: #{tpu_custom_call.1} parent=1 // pred_check_branch
      %26 = sbr.rel (0) target = $region13
    $region12: #{tpu_custom_call.1} parent=1 // pred_region
      %s28 = ssub.s32 256, 256
      %29 = vsyncadd [#allocation4], %s28
      %s31 = sshll.u32 [#allocation5], 4
      %s32 = int_to_ptr.vmem [resolvable:$true] %s31
      %34 = dma.vmem_to_hbm [thread:$0]  %s32, 256, %s1, [#allocation4]
    $region13: #{tpu_custom_call.1} parent=1 // pred_fallthru
      _
    // Predicated region
    $region14: #{tpu_custom_call.1} parent=1 // pred_check
      _
    $region15: #{tpu_custom_call.1} parent=1 // pred_check_branch
      %36 = sbr.rel (0) target = $region17
    $region16: #{tpu_custom_call.1} parent=1 // pred_region
      %37 = dma.done [#allocation4], 256
    $region17: #{tpu_custom_call.1} parent=1 // pred_fallthru
      _
    %38 = vsyncpa [#allocation3], 1
    %39 = vsyncpa [#allocation4], 1

</llo_original>
